<compile_context>
chip_gen: v5e
topology: v5e:2x2
jax: 0.10.0
libtpu: 0.0.40
codegen_flags: <defaults>
</compile_context>

<pallas_src>
import functools

import jax
import jax.numpy as jnp
from jax import lax
from jax.experimental import pallas as pl
from jax.experimental.pallas import tpu as pltpu


# ---------------------------------------------------------------------------
# In-kernel helpers
# ---------------------------------------------------------------------------

def _ln(x, g, b, eps):
    """LayerNorm over the last dim, f32 math. x: (M, D), g/b: (1, D)."""
    mu = jnp.mean(x, axis=-1, keepdims=True)
    xc = x - mu
    var = jnp.mean(xc * xc, axis=-1, keepdims=True)
    return xc * lax.rsqrt(var + eps) * g + b


# ---------------------------------------------------------------------------
# Fused attention block:  x -> LN1 -> QKV -> causal MHA -> O-proj -> +x
# One grid step = one batch element (all heads), so the write is a lane-dense (S, D) slab.
# ---------------------------------------------------------------------------

def _attn_block_kernel(x_ref, g_ref, b_ref, qkv_w_ref, qkv_b_ref,
                       o_w_ref, o_b_ref, mask_ref, out_ref,
                       *, heads, dh, scale, eps):
    x = x_ref[0]                                                   # (S, D) f32 residual stream
    h = _ln(x, g_ref[...], b_ref[...], eps)                        # pre-LN in f32

    # Fused QKV projection: one (S, D) x (D, 3D) matmul, bf16 operands, f32 accumulation.
    qkv = jnp.dot(h.astype(jnp.bfloat16), qkv_w_ref[...],
                  preferred_element_type=jnp.float32) + qkv_b_ref[...]   # (S, 3D)

    D = heads * dh
    mask = mask_ref[...]                                           # (S, S) additive causal mask
    head_outs = []
    for hh in range(heads):                                        # heads = compile-time constant
        q = qkv[:, hh * dh:(hh + 1) * dh] * scale
        k = qkv[:, D + hh * dh:D + (hh + 1) * dh]
        v = qkv[:, 2 * D + hh * dh:2 * D + (hh + 1) * dh]
        s = jnp.dot(q.astype(jnp.bfloat16), k.astype(jnp.bfloat16).T,
                    preferred_element_type=jnp.float32) + mask     # (S, S) f32
        m = jnp.max(s, axis=-1, keepdims=True)
        p = jnp.exp(s - m)
        p = p * pl.reciprocal(jnp.sum(p, axis=-1, keepdims=True), approx=True)
        head_outs.append(jnp.dot(p.astype(jnp.bfloat16), v.astype(jnp.bfloat16),
                                 preferred_element_type=jnp.float32))
    attn = jnp.concatenate(head_outs, axis=-1)                     # (S, D) lane-dense

    proj = jnp.dot(attn.astype(jnp.bfloat16), o_w_ref[...],
                   preferred_element_type=jnp.float32) + o_b_ref[...]
    out_ref[0] = x + proj                                          # fused residual add


def attn_block(x, ln_g, ln_b, qkv_w, qkv_b, o_w, o_b, mask, *, heads, eps=1e-5):
    """x: (B, S, D) f32 -> (B, S, D) f32. Grid over batch."""
    B, S, D = x.shape
    dh = D // heads
    kern = functools.partial(_attn_block_kernel, heads=heads, dh=dh,
                             scale=dh ** -0.5, eps=eps)
    const2d = lambda i: (0, 0)
    return pl.pallas_call(
        kern,
        out_shape=jax.ShapeDtypeStruct((B, S, D), jnp.float32),
        grid=(B,),
        in_specs=[
            pl.BlockSpec((1, S, D), lambda i: (i, 0, 0)),          # x
            pl.BlockSpec((1, D), const2d),                         # ln gamma
            pl.BlockSpec((1, D), const2d),                         # ln beta
            pl.BlockSpec((D, 3 * D), const2d),                     # qkv weight (bf16)
            pl.BlockSpec((1, 3 * D), const2d),                     # qkv bias
            pl.BlockSpec((D, D), const2d),                         # o weight (bf16)
            pl.BlockSpec((1, D), const2d),                         # o bias
            pl.BlockSpec((S, S), const2d),                         # additive causal mask
        ],
        out_specs=pl.BlockSpec((1, S, D), lambda i: (i, 0, 0)),
        compiler_params=pltpu.CompilerParams(dimension_semantics=("parallel",)),
    )(x, ln_g, ln_b, qkv_w, qkv_b, o_w, o_b, mask)


# ---------------------------------------------------------------------------
# Fused MLP block:  x -> LN2 -> FC1 -> quick-GELU -> FC2 -> +x
# Grid tiles the flattened B*S rows so DMA overlaps compute and v7x can shard rows.
# ---------------------------------------------------------------------------

def _mlp_block_kernel(x_ref, g_ref, b_ref, fc1_w_ref, fc1_b_ref,
                      fc2_w_ref, fc2_b_ref, out_ref, *, eps):
    x = x_ref[...]                                                 # (tm, D) f32
    h = _ln(x, g_ref[...], b_ref[...], eps)
    y = jnp.dot(h.astype(jnp.bfloat16), fc1_w_ref[...],
                preferred_element_type=jnp.float32) + fc1_b_ref[...]
    y = y * jax.nn.sigmoid(1.702 * y)                              # quick-GELU
    y = jnp.dot(y.astype(jnp.bfloat16), fc2_w_ref[...],
                preferred_element_type=jnp.float32) + fc2_b_ref[...]
    out_ref[...] = x + y                                           # fused residual add


def _pick_tile_m(M):
    for t in (512, 256, 128):
        if M % t == 0:
            return t
    return M


def mlp_block(x2d, ln_g, ln_b, fc1_w, fc1_b, fc2_w, fc2_b, *, eps=1e-5):
    """x2d: (B*S, D) f32 -> (B*S, D) f32."""
    M, D = x2d.shape
    F = fc1_w.shape[1]
    tm = _pick_tile_m(M)
    kern = functools.partial(_mlp_block_kernel, eps=eps)
    const2d = lambda i: (0, 0)
    return pl.pallas_call(
        kern,
        out_shape=jax.ShapeDtypeStruct((M, D), jnp.float32),
        grid=(M // tm,),
        in_specs=[
            pl.BlockSpec((tm, D), lambda i: (i, 0)),               # x rows
            pl.BlockSpec((1, D), const2d),                         # ln gamma
            pl.BlockSpec((1, D), const2d),                         # ln beta
            pl.BlockSpec((D, F), const2d),                         # fc1 weight (bf16)
            pl.BlockSpec((1, F), const2d),                         # fc1 bias
            pl.BlockSpec((F, D), const2d),                         # fc2 weight (bf16)
            pl.BlockSpec((1, D), const2d),                         # fc2 bias
        ],
        out_specs=pl.BlockSpec((tm, D), lambda i: (i, 0)),
        compiler_params=pltpu.CompilerParams(dimension_semantics=("parallel",)),
    )(x2d, ln_g, ln_b, fc1_w, fc1_b, fc2_w, fc2_b)


# ---------------------------------------------------------------------------
# Final fused kernel: LayerNorm(pooled EOS tokens) @ text_projection  (no bias)
# LayerNorm is per-token, so pooling-then-LN == LN-then-pooling; we pool first (glue)
# and only normalize/project B rows.
# ---------------------------------------------------------------------------

def _pool_proj_kernel(x_ref, g_ref, b_ref, w_ref, o_ref, *, eps):
    h = _ln(x_ref[...], g_ref[...], b_ref[...], eps)
    o_ref[...] = jnp.dot(h.astype(jnp.bfloat16), w_ref[...],
                         preferred_element_type=jnp.float32)


def pool_projection(pooled, ln_g, ln_b, proj_w, *, eps=1e-5):
    B, D = pooled.shape
    P = proj_w.shape[1]
    kern = functools.partial(_pool_proj_kernel, eps=eps)
    const2d = lambda i: (0, 0)
    return pl.pallas_call(
        kern,
        out_shape=jax.ShapeDtypeStruct((B, P), jnp.float32),
        grid=(1,),
        in_specs=[
            pl.BlockSpec((B, D), const2d),
            pl.BlockSpec((1, D), const2d),
            pl.BlockSpec((1, D), const2d),
            pl.BlockSpec((D, P), const2d),
        ],
        out_specs=pl.BlockSpec((B, P), const2d),
    )(pooled, ln_g, ln_b, proj_w)


# ---------------------------------------------------------------------------
# Parameters (CLIP text transformer) & forward
# ---------------------------------------------------------------------------

def init_params(key, *, vocab, max_pos, hidden, heads, layers, mlp, proj):
    scale = 0.02
    keys = jax.random.split(key, 4 + layers)
    p = {
        "token_embedding": scale * jax.random.normal(keys[0], (vocab, hidden), jnp.float32),
        "position_embedding": scale * jax.random.normal(keys[1], (max_pos, hidden), jnp.float32),
        "final_ln_g": jnp.ones((1, hidden), jnp.float32),
        "final_ln_b": jnp.zeros((1, hidden), jnp.float32),
        # Matmul weights stored in bf16 (MXU operands); accumulation stays f32.
        "text_projection": (scale * jax.random.normal(keys[2], (hidden, proj), jnp.float32)
                            ).astype(jnp.bfloat16),
        "layers": [],
    }
    for li in range(layers):
        lk = jax.random.split(keys[4 + li], 6)
        q_w = scale * jax.random.normal(lk[0], (hidden, hidden), jnp.float32)
        k_w = scale * jax.random.normal(lk[1], (hidden, hidden), jnp.float32)
        v_w = scale * jax.random.normal(lk[2], (hidden, hidden), jnp.float32)
        layer = {
            "ln1_g": jnp.ones((1, hidden), jnp.float32),
            "ln1_b": jnp.zeros((1, hidden), jnp.float32),
            # Fused QKV projection weight/bias.
            "qkv_w": jnp.concatenate([q_w, k_w, v_w], axis=1).astype(jnp.bfloat16),
            "qkv_b": jnp.zeros((1, 3 * hidden), jnp.float32),
            "o_w": (scale * jax.random.normal(lk[3], (hidden, hidden), jnp.float32)
                    ).astype(jnp.bfloat16),
            "o_b": jnp.zeros((1, hidden), jnp.float32),
            "ln2_g": jnp.ones((1, hidden), jnp.float32),
            "ln2_b": jnp.zeros((1, hidden), jnp.float32),
            "fc1_w": (scale * jax.random.normal(lk[4], (hidden, mlp), jnp.float32)
                      ).astype(jnp.bfloat16),
            "fc1_b": jnp.zeros((1, mlp), jnp.float32),
            "fc2_w": (scale * jax.random.normal(lk[5], (mlp, hidden), jnp.float32)
                      ).astype(jnp.bfloat16),
            "fc2_b": jnp.zeros((1, hidden), jnp.float32),
        }
        p["layers"].append(layer)
    return p


def prompt_encoder_forward(input_ids, params, *, heads):
    """Equivalent of PromptEncoder.forward(prompts) == clip_model.get_text_features(prompts)."""
    B, S = input_ids.shape
    D = params["token_embedding"].shape[1]

    # Embedding lookups (glue: gathers).
    x = params["token_embedding"][input_ids] + params["position_embedding"][:S][None, :, :]

    # Additive causal mask, built once and reused by every attention kernel call.
    idx = jnp.arange(S)
    causal_mask = jnp.where(idx[None, :] <= idx[:, None], 0.0, -1e9).astype(jnp.float32)

    for layer in params["layers"]:
        # Fused: LN1 + QKV + causal multi-head attention + O-proj + residual.
        x = attn_block(x, layer["ln1_g"], layer["ln1_b"],
                       layer["qkv_w"], layer["qkv_b"],
                       layer["o_w"], layer["o_b"], causal_mask, heads=heads)
        # Fused: LN2 + FC1 + quick-GELU + FC2 + residual.
        x = mlp_block(x.reshape(B * S, D), layer["ln2_g"], layer["ln2_b"],
                      layer["fc1_w"], layer["fc1_b"],
                      layer["fc2_w"], layer["fc2_b"]).reshape(B, S, D)

    # Pool at the EOS token (highest token id), like HF CLIP. (glue: gather)
    eos_idx = jnp.argmax(input_ids, axis=-1)
    pooled = x[jnp.arange(B), eos_idx]                              # (B, D)

    # Fused final LayerNorm + text projection (no bias).
    return pool_projection(pooled, params["final_ln_g"], params["final_ln_b"],
                           params["text_projection"])


if __name__ == "__main__":
    # Small shapes consistent with a CLIP text encoder.
    VOCAB, MAX_POS = 64, 8
    B, S, HIDDEN, HEADS, LAYERS, MLP, PROJ = 2, 8, 32, 4, 2, 64, 32

    key = jax.random.PRNGKey(0)
    k_params, k_ids = jax.random.split(key)

    params = init_params(k_params, vocab=VOCAB, max_pos=MAX_POS, hidden=HIDDEN,
                         heads=HEADS, layers=LAYERS, mlp=MLP, proj=PROJ)

    # prompts == tokenized input ids; last token is the EOT token (highest id).
    input_ids = jax.random.randint(k_ids, (B, S), 1, VOCAB - 1, dtype=jnp.int32)
    input_ids = input_ids.at[:, -1].set(VOCAB - 1)

    feats = prompt_encoder_forward(input_ids, params, heads=HEADS)
    feats = jax.block_until_ready(feats)

    assert feats.shape == (B, PROJ) and feats.dtype == jnp.float32
    assert bool(jnp.all(jnp.isfinite(feats)))
    print("KERNEL_OK")
</pallas_src>

<mosaic_0001>
module attributes {stable_mosaic.version = 11 : i64} {
  func.func @_attn_block_kernel(%arg0: i32, %arg1: memref<1x8x32xf32, #tpu.memory_space<vmem>>, %arg2: memref<1x32xf32, #tpu.memory_space<vmem>>, %arg3: memref<1x32xf32, #tpu.memory_space<vmem>>, %arg4: memref<32x96xbf16, #tpu.memory_space<vmem>>, %arg5: memref<1x96xf32, #tpu.memory_space<vmem>>, %arg6: memref<32x32xbf16, #tpu.memory_space<vmem>>, %arg7: memref<1x32xf32, #tpu.memory_space<vmem>>, %arg8: memref<8x8xf32, #tpu.memory_space<vmem>>, %arg9: memref<1x8x32xf32, #tpu.memory_space<vmem>>) attributes {dimension_semantics = [#tpu.dimension_semantics<parallel>], iteration_bounds = array<i64: 2>, scalar_prefetch = 0 : i64, scratch_operands = 0 : i64, tpu.core_type = #tpu.core_type<tc>, window_params = [{transform_indices = @transform_0, window_bounds = array<i64: 1, 8, 32>}, {pipeline_mode = #tpu.pipeline_mode<synchronous>, transform_indices = @transform_1, window_bounds = array<i64: 1, 32>}, {pipeline_mode = #tpu.pipeline_mode<synchronous>, transform_indices = @transform_2, window_bounds = array<i64: 1, 32>}, {pipeline_mode = #tpu.pipeline_mode<synchronous>, transform_indices = @transform_3, window_bounds = array<i64: 32, 96>}, {pipeline_mode = #tpu.pipeline_mode<synchronous>, transform_indices = @transform_4, window_bounds = array<i64: 1, 96>}, {pipeline_mode = #tpu.pipeline_mode<synchronous>, transform_indices = @transform_5, window_bounds = array<i64: 32, 32>}, {pipeline_mode = #tpu.pipeline_mode<synchronous>, transform_indices = @transform_6, window_bounds = array<i64: 1, 32>}, {pipeline_mode = #tpu.pipeline_mode<synchronous>, transform_indices = @transform_7, window_bounds = array<i64: 8, 8>}, {transform_indices = @transform_8, window_bounds = array<i64: 1, 8, 32>}]} {
    %c0 = arith.constant 0 : index
    %c0_0 = arith.constant 0 : index
    %c0_1 = arith.constant 0 : index
    %0 = vector.load %arg1[%c0, %c0_0, %c0_1] : memref<1x8x32xf32, #tpu.memory_space<vmem>>, vector<1x8x32xf32>
    %1 = vector.shape_cast %0 : vector<1x8x32xf32> to vector<8x32xf32>
    %c0_2 = arith.constant 0 : index
    %c0_3 = arith.constant 0 : index
    %2 = vector.load %arg2[%c0_2, %c0_3] : memref<1x32xf32, #tpu.memory_space<vmem>>, vector<1x32xf32>
    %c0_4 = arith.constant 0 : index
    %c0_5 = arith.constant 0 : index
    %3 = vector.load %arg3[%c0_4, %c0_5] : memref<1x32xf32, #tpu.memory_space<vmem>>, vector<1x32xf32>
    %cst = arith.constant dense<0.000000e+00> : vector<8xf32>
    %4 = vector.multi_reduction <add>, %1, %cst [1] : vector<8x32xf32> to vector<8xf32>
    %5 = vector.shape_cast %4 : vector<8xf32> to vector<8x1xf32>
    %cst_6 = arith.constant 3.200000e+01 : f32
    %6 = vector.broadcast %cst_6 : f32 to vector<8x1xf32>
    %7 = arith.divf %5, %6 : vector<8x1xf32>
    %8 = vector.broadcast %7 : vector<8x1xf32> to vector<8x32xf32>
    %9 = arith.subf %1, %8 : vector<8x32xf32>
    %10 = arith.mulf %9, %9 : vector<8x32xf32>
    %cst_7 = arith.constant dense<0.000000e+00> : vector<8xf32>
    %11 = vector.multi_reduction <add>, %10, %cst_7 [1] : vector<8x32xf32> to vector<8xf32>
    %12 = vector.shape_cast %11 : vector<8xf32> to vector<8x1xf32>
    %cst_8 = arith.constant 3.200000e+01 : f32
    %13 = vector.broadcast %cst_8 : f32 to vector<8x1xf32>
    %14 = arith.divf %12, %13 : vector<8x1xf32>
    %cst_9 = arith.constant 9.99999974E-6 : f32
    %15 = vector.broadcast %cst_9 : f32 to vector<8x1xf32>
    %16 = arith.addf %14, %15 : vector<8x1xf32>
    %17 = math.rsqrt %16 : vector<8x1xf32>
    %18 = vector.broadcast %17 : vector<8x1xf32> to vector<8x32xf32>
    %19 = arith.mulf %9, %18 : vector<8x32xf32>
    %20 = vector.broadcast %2 : vector<1x32xf32> to vector<8x32xf32>
    %21 = arith.mulf %19, %20 : vector<8x32xf32>
    %22 = vector.broadcast %3 : vector<1x32xf32> to vector<8x32xf32>
    %23 = arith.addf %21, %22 : vector<8x32xf32>
    %24 = arith.truncf %23 : vector<8x32xf32> to vector<8x32xbf16>
    %c0_10 = arith.constant 0 : index
    %c0_11 = arith.constant 0 : index
    %25 = vector.load %arg4[%c0_10, %c0_11] : memref<32x96xbf16, #tpu.memory_space<vmem>>, vector<32x96xbf16>
    %cst_12 = arith.constant dense<0.000000e+00> : vector<8x96xf32>
    %26 = tpu.matmul %24, %25, %cst_12 {dimension_numbers = #tpu.dot_dimension_numbers<[1], [0], [0], [1], [0, 0, 1, 1], [], []>} : vector<8x32xbf16>, vector<32x96xbf16>, vector<8x96xf32> -> vector<8x96xf32>
    %c0_13 = arith.constant 0 : index
    %c0_14 = arith.constant 0 : index
    %27 = vector.load %arg5[%c0_13, %c0_14] : memref<1x96xf32, #tpu.memory_space<vmem>>, vector<1x96xf32>
    %28 = vector.broadcast %27 : vector<1x96xf32> to vector<8x96xf32>
    %29 = arith.addf %26, %28 : vector<8x96xf32>
    %c0_15 = arith.constant 0 : index
    %c0_16 = arith.constant 0 : index
    %30 = vector.load %arg8[%c0_15, %c0_16] : memref<8x8xf32, #tpu.memory_space<vmem>>, vector<8x8xf32>
    %31 = vector.extract_strided_slice %29 {offsets = [0, 0], sizes = [8, 8], strides = [1, 1]} : vector<8x96xf32> to vector<8x8xf32>
    %cst_17 = arith.constant 0.353553385 : f32
    %32 = vector.broadcast %cst_17 : f32 to vector<8x8xf32>
    %33 = arith.mulf %31, %32 : vector<8x8xf32>
    %34 = vector.extract_strided_slice %29 {offsets = [0, 32], sizes = [8, 8], strides = [1, 1]} : vector<8x96xf32> to vector<8x8xf32>
    %35 = vector.extract_strided_slice %29 {offsets = [0, 64], sizes = [8, 8], strides = [1, 1]} : vector<8x96xf32> to vector<8x8xf32>
    %36 = arith.truncf %33 : vector<8x8xf32> to vector<8x8xbf16>
    %37 = arith.truncf %34 : vector<8x8xf32> to vector<8x8xbf16>
    %38 = tpu.transpose %37, [1, 0] : vector<8x8xbf16> -> vector<8x8xbf16>
    %cst_18 = arith.constant dense<0.000000e+00> : vector<8x8xf32>
    %39 = tpu.matmul %36, %38, %cst_18 {dimension_numbers = #tpu.dot_dimension_numbers<[1], [0], [0], [1], [0, 0, 1, 1], [], []>} : vector<8x8xbf16>, vector<8x8xbf16>, vector<8x8xf32> -> vector<8x8xf32>
    %40 = arith.addf %39, %30 : vector<8x8xf32>
    %cst_19 = arith.constant dense<0xFF800000> : vector<8xf32>
    %41 = vector.multi_reduction <maximumf>, %40, %cst_19 [1] : vector<8x8xf32> to vector<8xf32>
    %42 = vector.shape_cast %41 : vector<8xf32> to vector<8x1xf32>
    %43 = vector.broadcast %42 : vector<8x1xf32> to vector<8x8xf32>
    %44 = arith.subf %40, %43 : vector<8x8xf32>
    %45 = math.exp %44 : vector<8x8xf32>
    %cst_20 = arith.constant dense<0.000000e+00> : vector<8xf32>
    %46 = vector.multi_reduction <add>, %45, %cst_20 [1] : vector<8x8xf32> to vector<8xf32>
    %47 = vector.shape_cast %46 : vector<8xf32> to vector<8x1xf32>
    %48 = tpu.reciprocal %47 {approx = true} : vector<8x1xf32> -> vector<8x1xf32>
    %49 = vector.broadcast %48 : vector<8x1xf32> to vector<8x8xf32>
    %50 = arith.mulf %45, %49 : vector<8x8xf32>
    %51 = arith.truncf %50 : vector<8x8xf32> to vector<8x8xbf16>
    %52 = arith.truncf %35 : vector<8x8xf32> to vector<8x8xbf16>
    %cst_21 = arith.constant dense<0.000000e+00> : vector<8x8xf32>
    %53 = tpu.matmul %51, %52, %cst_21 {dimension_numbers = #tpu.dot_dimension_numbers<[1], [0], [0], [1], [0, 0, 1, 1], [], []>} : vector<8x8xbf16>, vector<8x8xbf16>, vector<8x8xf32> -> vector<8x8xf32>
    %54 = vector.extract_strided_slice %29 {offsets = [0, 8], sizes = [8, 8], strides = [1, 1]} : vector<8x96xf32> to vector<8x8xf32>
    %cst_22 = arith.constant 0.353553385 : f32
    %55 = vector.broadcast %cst_22 : f32 to vector<8x8xf32>
    %56 = arith.mulf %54, %55 : vector<8x8xf32>
    %57 = vector.extract_strided_slice %29 {offsets = [0, 40], sizes = [8, 8], strides = [1, 1]} : vector<8x96xf32> to vector<8x8xf32>
    %58 = vector.extract_strided_slice %29 {offsets = [0, 72], sizes = [8, 8], strides = [1, 1]} : vector<8x96xf32> to vector<8x8xf32>
    %59 = arith.truncf %56 : vector<8x8xf32> to vector<8x8xbf16>
    %60 = arith.truncf %57 : vector<8x8xf32> to vector<8x8xbf16>
    %61 = tpu.transpose %60, [1, 0] : vector<8x8xbf16> -> vector<8x8xbf16>
    %cst_23 = arith.constant dense<0.000000e+00> : vector<8x8xf32>
    %62 = tpu.matmul %59, %61, %cst_23 {dimension_numbers = #tpu.dot_dimension_numbers<[1], [0], [0], [1], [0, 0, 1, 1], [], []>} : vector<8x8xbf16>, vector<8x8xbf16>, vector<8x8xf32> -> vector<8x8xf32>
    %63 = arith.addf %62, %30 : vector<8x8xf32>
    %cst_24 = arith.constant dense<0xFF800000> : vector<8xf32>
    %64 = vector.multi_reduction <maximumf>, %63, %cst_24 [1] : vector<8x8xf32> to vector<8xf32>
    %65 = vector.shape_cast %64 : vector<8xf32> to vector<8x1xf32>
    %66 = vector.broadcast %65 : vector<8x1xf32> to vector<8x8xf32>
    %67 = arith.subf %63, %66 : vector<8x8xf32>
    %68 = math.exp %67 : vector<8x8xf32>
    %cst_25 = arith.constant dense<0.000000e+00> : vector<8xf32>
    %69 = vector.multi_reduction <add>, %68, %cst_25 [1] : vector<8x8xf32> to vector<8xf32>
    %70 = vector.shape_cast %69 : vector<8xf32> to vector<8x1xf32>
    %71 = tpu.reciprocal %70 {approx = true} : vector<8x1xf32> -> vector<8x1xf32>
    %72 = vector.broadcast %71 : vector<8x1xf32> to vector<8x8xf32>
    %73 = arith.mulf %68, %72 : vector<8x8xf32>
    %74 = arith.truncf %73 : vector<8x8xf32> to vector<8x8xbf16>
    %75 = arith.truncf %58 : vector<8x8xf32> to vector<8x8xbf16>
    %cst_26 = arith.constant dense<0.000000e+00> : vector<8x8xf32>
    %76 = tpu.matmul %74, %75, %cst_26 {dimension_numbers = #tpu.dot_dimension_numbers<[1], [0], [0], [1], [0, 0, 1, 1], [], []>} : vector<8x8xbf16>, vector<8x8xbf16>, vector<8x8xf32> -> vector<8x8xf32>
    %77 = vector.extract_strided_slice %29 {offsets = [0, 16], sizes = [8, 8], strides = [1, 1]} : vector<8x96xf32> to vector<8x8xf32>
    %cst_27 = arith.constant 0.353553385 : f32
    %78 = vector.broadcast %cst_27 : f32 to vector<8x8xf32>
    %79 = arith.mulf %77, %78 : vector<8x8xf32>
    %80 = vector.extract_strided_slice %29 {offsets = [0, 48], sizes = [8, 8], strides = [1, 1]} : vector<8x96xf32> to vector<8x8xf32>
    %81 = vector.extract_strided_slice %29 {offsets = [0, 80], sizes = [8, 8], strides = [1, 1]} : vector<8x96xf32> to vector<8x8xf32>
    %82 = arith.truncf %79 : vector<8x8xf32> to vector<8x8xbf16>
    %83 = arith.truncf %80 : vector<8x8xf32> to vector<8x8xbf16>
    %84 = tpu.transpose %83, [1, 0] : vector<8x8xbf16> -> vector<8x8xbf16>
    %cst_28 = arith.constant dense<0.000000e+00> : vector<8x8xf32>
    %85 = tpu.matmul %82, %84, %cst_28 {dimension_numbers = #tpu.dot_dimension_numbers<[1], [0], [0], [1], [0, 0, 1, 1], [], []>} : vector<8x8xbf16>, vector<8x8xbf16>, vector<8x8xf32> -> vector<8x8xf32>
    %86 = arith.addf %85, %30 : vector<8x8xf32>
    %cst_29 = arith.constant dense<0xFF800000> : vector<8xf32>
    %87 = vector.multi_reduction <maximumf>, %86, %cst_29 [1] : vector<8x8xf32> to vector<8xf32>
    %88 = vector.shape_cast %87 : vector<8xf32> to vector<8x1xf32>
    %89 = vector.broadcast %88 : vector<8x1xf32> to vector<8x8xf32>
    %90 = arith.subf %86, %89 : vector<8x8xf32>
    %91 = math.exp %90 : vector<8x8xf32>
    %cst_30 = arith.constant dense<0.000000e+00> : vector<8xf32>
    %92 = vector.multi_reduction <add>, %91, %cst_30 [1] : vector<8x8xf32> to vector<8xf32>
    %93 = vector.shape_cast %92 : vector<8xf32> to vector<8x1xf32>
    %94 = tpu.reciprocal %93 {approx = true} : vector<8x1xf32> -> vector<8x1xf32>
    %95 = vector.broadcast %94 : vector<8x1xf32> to vector<8x8xf32>
    %96 = arith.mulf %91, %95 : vector<8x8xf32>
    %97 = arith.truncf %96 : vector<8x8xf32> to vector<8x8xbf16>
    %98 = arith.truncf %81 : vector<8x8xf32> to vector<8x8xbf16>
    %cst_31 = arith.constant dense<0.000000e+00> : vector<8x8xf32>
    %99 = tpu.matmul %97, %98, %cst_31 {dimension_numbers = #tpu.dot_dimension_numbers<[1], [0], [0], [1], [0, 0, 1, 1], [], []>} : vector<8x8xbf16>, vector<8x8xbf16>, vector<8x8xf32> -> vector<8x8xf32>
    %100 = vector.extract_strided_slice %29 {offsets = [0, 24], sizes = [8, 8], strides = [1, 1]} : vector<8x96xf32> to vector<8x8xf32>
    %cst_32 = arith.constant 0.353553385 : f32
    %101 = vector.broadcast %cst_32 : f32 to vector<8x8xf32>
    %102 = arith.mulf %100, %101 : vector<8x8xf32>
    %103 = vector.extract_strided_slice %29 {offsets = [0, 56], sizes = [8, 8], strides = [1, 1]} : vector<8x96xf32> to vector<8x8xf32>
    %104 = vector.extract_strided_slice %29 {offsets = [0, 88], sizes = [8, 8], strides = [1, 1]} : vector<8x96xf32> to vector<8x8xf32>
    %105 = arith.truncf %102 : vector<8x8xf32> to vector<8x8xbf16>
    %106 = arith.truncf %103 : vector<8x8xf32> to vector<8x8xbf16>
    %107 = tpu.transpose %106, [1, 0] : vector<8x8xbf16> -> vector<8x8xbf16>
    %cst_33 = arith.constant dense<0.000000e+00> : vector<8x8xf32>
    %108 = tpu.matmul %105, %107, %cst_33 {dimension_numbers = #tpu.dot_dimension_numbers<[1], [0], [0], [1], [0, 0, 1, 1], [], []>} : vector<8x8xbf16>, vector<8x8xbf16>, vector<8x8xf32> -> vector<8x8xf32>
    %109 = arith.addf %108, %30 : vector<8x8xf32>
    %cst_34 = arith.constant dense<0xFF800000> : vector<8xf32>
    %110 = vector.multi_reduction <maximumf>, %109, %cst_34 [1] : vector<8x8xf32> to vector<8xf32>
    %111 = vector.shape_cast %110 : vector<8xf32> to vector<8x1xf32>
    %112 = vector.broadcast %111 : vector<8x1xf32> to vector<8x8xf32>
    %113 = arith.subf %109, %112 : vector<8x8xf32>
    %114 = math.exp %113 : vector<8x8xf32>
    %cst_35 = arith.constant dense<0.000000e+00> : vector<8xf32>
    %115 = vector.multi_reduction <add>, %114, %cst_35 [1] : vector<8x8xf32> to vector<8xf32>
    %116 = vector.shape_cast %115 : vector<8xf32> to vector<8x1xf32>
    %117 = tpu.reciprocal %116 {approx = true} : vector<8x1xf32> -> vector<8x1xf32>
    %118 = vector.broadcast %117 : vector<8x1xf32> to vector<8x8xf32>
    %119 = arith.mulf %114, %118 : vector<8x8xf32>
    %120 = arith.truncf %119 : vector<8x8xf32> to vector<8x8xbf16>
    %121 = arith.truncf %104 : vector<8x8xf32> to vector<8x8xbf16>
    %cst_36 = arith.constant dense<0.000000e+00> : vector<8x8xf32>
    %122 = tpu.matmul %120, %121, %cst_36 {dimension_numbers = #tpu.dot_dimension_numbers<[1], [0], [0], [1], [0, 0, 1, 1], [], []>} : vector<8x8xbf16>, vector<8x8xbf16>, vector<8x8xf32> -> vector<8x8xf32>
    %123 = tpu.concatenate %53, %76, %99, %122 in 1 : vector<8x8xf32>, vector<8x8xf32>, vector<8x8xf32>, vector<8x8xf32> -> vector<8x32xf32>
    %124 = arith.truncf %123 : vector<8x32xf32> to vector<8x32xbf16>
    %c0_37 = arith.constant 0 : index
    %c0_38 = arith.constant 0 : index
    %125 = vector.load %arg6[%c0_37, %c0_38] : memref<32x32xbf16, #tpu.memory_space<vmem>>, vector<32x32xbf16>
    %cst_39 = arith.constant dense<0.000000e+00> : vector<8x32xf32>
    %126 = tpu.matmul %124, %125, %cst_39 {dimension_numbers = #tpu.dot_dimension_numbers<[1], [0], [0], [1], [0, 0, 1, 1], [], []>} : vector<8x32xbf16>, vector<32x32xbf16>, vector<8x32xf32> -> vector<8x32xf32>
    %c0_40 = arith.constant 0 : index
    %c0_41 = arith.constant 0 : index
    %127 = vector.load %arg7[%c0_40, %c0_41] : memref<1x32xf32, #tpu.memory_space<vmem>>, vector<1x32xf32>
    %128 = vector.broadcast %127 : vector<1x32xf32> to vector<8x32xf32>
    %129 = arith.addf %126, %128 : vector<8x32xf32>
    %130 = arith.addf %1, %129 : vector<8x32xf32>
    %c0_42 = arith.constant 0 : index
    %c0_43 = arith.constant 0 : index
    %c0_44 = arith.constant 0 : index
    %131 = vector.load %arg9[%c0_42, %c0_43, %c0_44] : memref<1x8x32xf32, #tpu.memory_space<vmem>>, vector<1x8x32xf32>
    %132 = vector.shape_cast %131 : vector<1x8x32xf32> to vector<8x32xf32>
    %133 = vector.shape_cast %130 : vector<8x32xf32> to vector<1x8x32xf32>
    tpu.vector_store %arg9[%c0_42, %c0_43, %c0_44], %133 {strides = array<i32>} : memref<1x8x32xf32, #tpu.memory_space<vmem>>, vector<1x8x32xf32>,
    return
  }
  func.func @transform_0(%arg0: i32) -> (i32, i32, i32) {
    %c0_i32 = arith.constant 0 : i32
    %c0_i32_0 = arith.constant 0 : i32
    %c0_i32_1 = arith.constant 0 : i32
    return %arg0, %c0_i32, %c0_i32_0 : i32, i32, i32
  }
  func.func @transform_1(%arg0: i32) -> (i32, i32) {
    %c0_i32 = arith.constant 0 : i32
    %c0_i32_0 = arith.constant 0 : i32
    %c0_i32_1 = arith.constant 0 : i32
    return %c0_i32, %c0_i32_0 : i32, i32
  }
  func.func @transform_2(%arg0: i32) -> (i32, i32) {
    %c0_i32 = arith.constant 0 : i32
    %c0_i32_0 = arith.constant 0 : i32
    %c0_i32_1 = arith.constant 0 : i32
    return %c0_i32, %c0_i32_0 : i32, i32
  }
  func.func @transform_3(%arg0: i32) -> (i32, i32) {
    %c0_i32 = arith.constant 0 : i32
    %c0_i32_0 = arith.constant 0 : i32
    %c0_i32_1 = arith.constant 0 : i32
    return %c0_i32, %c0_i32_0 : i32, i32
  }
  func.func @transform_4(%arg0: i32) -> (i32, i32) {
    %c0_i32 = arith.constant 0 : i32
    %c0_i32_0 = arith.constant 0 : i32
    %c0_i32_1 = arith.constant 0 : i32
    return %c0_i32, %c0_i32_0 : i32, i32
  }
  func.func @transform_5(%arg0: i32) -> (i32, i32) {
    %c0_i32 = arith.constant 0 : i32
    %c0_i32_0 = arith.constant 0 : i32
    %c0_i32_1 = arith.constant 0 : i32
    return %c0_i32, %c0_i32_0 : i32, i32
  }
  func.func @transform_6(%arg0: i32) -> (i32, i32) {
    %c0_i32 = arith.constant 0 : i32
    %c0_i32_0 = arith.constant 0 : i32
    %c0_i32_1 = arith.constant 0 : i32
    return %c0_i32, %c0_i32_0 : i32, i32
  }
  func.func @transform_7(%arg0: i32) -> (i32, i32) {
    %c0_i32 = arith.constant 0 : i32
    %c0_i32_0 = arith.constant 0 : i32
    %c0_i32_1 = arith.constant 0 : i32
    return %c0_i32, %c0_i32_0 : i32, i32
  }
  func.func @transform_8(%arg0: i32) -> (i32, i32, i32) {
    %c0_i32 = arith.constant 0 : i32
    %c0_i32_0 = arith.constant 0 : i32
    %c0_i32_1 = arith.constant 0 : i32
    return %arg0, %c0_i32, %c0_i32_0 : i32, i32, i32
  }
}

</mosaic_0001>

<llo_original>
// kernel: tpu_custom_call.1
$region0: #{tpu_custom_call.1}
  #allocation0 [shape = 'u32[]', space=smem, size = 0x4, offset = 0x4, fixed_abs, tag = 'smem constant byte address 0x4 - core index']
  #allocation1 [shape = 'u32[72,128]{1,0:T(1,128)}', space=vmem, size = 0x9000, scoped, tag = 'internal scratch']
  %s0 = inlined_call_operand.hbm [shape: f32[2,8,32], index: 0, kind: input, shape index: {}]
  %s1 = inlined_call_operand.hbm [shape: f32[1,32], index: 1, kind: input, shape index: {}]
  %s2 = inlined_call_operand.vmem [shape: f32[1,32], index: 2, kind: input, shape index: {}]
  %s3 = inlined_call_operand.hbm [shape: bf16[32,96], index: 3, kind: input, shape index: {}]
  %s4 = inlined_call_operand.vmem [shape: f32[1,96], index: 4, kind: input, shape index: {}]
  %s5 = inlined_call_operand.hbm [shape: bf16[32,32], index: 5, kind: input, shape index: {}]
  %s6 = inlined_call_operand.vmem [shape: f32[1,32], index: 6, kind: input, shape index: {}]
  %s7 = inlined_call_operand.hbm [shape: f32[8,8], index: 7, kind: input, shape index: {}]
  %s8 = inlined_call_operand.hbm [shape: f32[2,8,32], index: 8, kind: output, shape index: {}]
  %s9 = sld [smem:[#allocation0]]
  $region85: #{tpu_custom_call.1} parent=0
    _
  %s11 = ssub.s32 1, %s9
  %s12 = scalar_select 0, %s11, %s9
  $region1: #{tpu_custom_call.1} parent=0
    #allocation2 [shape = 'u8[8192]{0}', space=vmem, size = 0x2000, scoped, tag = 'input window, operand 0']
    #allocation3 [shape = 's32[2]{0}', space=sflag, size = 0x8, scoped, tag = 'scoped memory for tpu_custom_call.1']
    #allocation4 [shape = 's32[2]{0}', space=sflag, size = 0x8, scoped, tag = 'scoped memory for tpu_custom_call.1']
    #allocation5 [shape = 'u8[512]{0}', space=vmem, size = 0x400, scoped, tag = 'input window, operand 1, single buffered']
    #allocation6 [shape = 's32[1]{0}', space=sflag, size = 0x4, scoped, tag = 'scoped memory for tpu_custom_call.1']
    #allocation7 [shape = 'u8[8192]{0}', space=vmem, size = 0x2000, scoped, tag = 'input window, operand 3, single buffered']
    #allocation8 [shape = 'u8[8192]{0}', space=vmem, size = 0x2000, scoped, tag = 'input window, operand 5, single buffered']
    #allocation9 [shape = 's32[1]{0}', space=sflag, size = 0x4, scoped, tag = 'scoped memory for tpu_custom_call.1']
    #allocation10 [shape = 'u8[4096]{0}', space=vmem, size = 0x1000, scoped, tag = 'input window, operand 7, single buffered']
    #allocation11 [shape = 'u8[8192]{0}', space=vmem, size = 0x2000, scoped, tag = 'output window, operand 0']
    %13 = vsyncpa [#allocation3], 0
    %s14 = scalar_lea.sflag [#allocation3], 1
    %15 = vsyncpa %s14, 0
    %16 = vsyncpa [#allocation6], 0
    %17 = vsyncpa [#allocation9], 0
    %18 = vsyncpa [#allocation4], 0
    %s19 = scalar_lea.sflag [#allocation4], 1
    %20 = vsyncpa %s19, 0
    loop: start=0, step=1, limit=4
    $region2: #{tpu_custom_call.1} parent=1 // loop_pre_header
      _
    $region3: #{tpu_custom_call.1} parent=1 // loop_header
      %s22 = sphi 0, %s26
      %p23 = scmp.ge.s32.totalorder %s22, 4
      %s32 = sphi 0, %s34
      %s35 = sphi 0, %s32
      %s36 = sphi 0, %s35
      %s52 = sphi 0, %s36
      %s56 = sphi 0, %s56
      %s58 = sphi 0, %s56
      %s59 = sphi 0, %s58
      %s73 = sphi 0, %s59
      %s77 = sphi 0, %s77
      %s79 = sphi 0, %s77
      %s80 = sphi 0, %s79
      %s94 = sphi 0, %s80
      %s98 = sphi 0, %s98
      %s100 = sphi 0, %s98
      %s101 = sphi 0, %s100
      %s115 = sphi 0, %s101
      %s119 = sphi 0, %s119
      %s121 = sphi 0, %s119
      %s122 = sphi 0, %s121
      %s136 = sphi 0, %s122
      %s140 = sphi 0, %s140
      %s142 = sphi 0, %s140
      %s143 = sphi 0, %s142
      %s157 = sphi 0, %s143
      %s161 = sphi 0, %s161
      %s163 = sphi 0, %s161
      %s164 = sphi 0, %s163
      %s178 = sphi 0, %s164
      %s182 = sphi 0, %s182
      %s184 = sphi 0, %s182
      %s185 = sphi 0, %s184
      %s199 = sphi 0, %s185
      %s205 = sphi 0, %s207
      %s208 = sphi 0, %s205
      %s209 = sphi 0, %s208
      %s225 = sphi 0, %s209
    $region4: #{tpu_custom_call.1} parent=1 // loop_header_branch
      %25 = sbr.rel (%p23) target = $region8
    $region5: #{tpu_custom_call.1} parent=1 // loop_body
      %s27 = ssub.s32 %s22, 1
      %s28 = ssub.s32 %s22, 2
      %s29 = sadd.s32 %s22, 1
      %s30 = ssub.s32 %s22, %s29
      %p31 = scmp.eq.s32.totalorder %s30, 0
      %s33 = sadd.s32 %s32, 1
      %s34 = scalar_select %p31, %s32, %s33
      %p37 = pneg %p31
      %p38 = scmp.eq.s32.totalorder %s22, 1
      %p39 = por %p37, %p38
      %p40 = scmp.ne.s32.totalorder %s32, %s35
      %p41 = scmp.eq.s32.totalorder %s22, 0
      %p42 = por %p40, %p41
      %p43 = scmp.ne.s32.totalorder %s32, %s35
      %p44 = scmp.eq.s32.totalorder %s27, 1
      %p45 = por %p43, %p44
      %p46 = scmp.ne.s32.totalorder %s35, %s36
      %p47 = scmp.eq.s32.totalorder %s27, 0
      %p48 = por %p46, %p47
      %p49 = scmp.ne.s32.totalorder %s35, %s36
      %p50 = scmp.eq.s32.totalorder %s28, 1
      %p51 = por %p49, %p50
      %p53 = scmp.ne.s32.totalorder %s36, %s52
      %p54 = scmp.eq.s32.totalorder %s28, 0
      %p55 = por %p53, %p54
      %s57 = sadd.s32 %s56, 1
      %p60 = scmp.eq.s32.totalorder %s22, 1
      %p61 = scmp.ne.s32.totalorder %s56, %s58
      %p62 = scmp.eq.s32.totalorder %s22, 0
      %p63 = por %p61, %p62
      %p64 = scmp.ne.s32.totalorder %s56, %s58
      %p65 = scmp.eq.s32.totalorder %s27, 1
      %p66 = por %p64, %p65
      %p67 = scmp.ne.s32.totalorder %s58, %s59
      %p68 = scmp.eq.s32.totalorder %s27, 0
      %p69 = por %p67, %p68
      %p70 = scmp.ne.s32.totalorder %s58, %s59
      %p71 = scmp.eq.s32.totalorder %s28, 1
      %p72 = por %p70, %p71
      %p74 = scmp.ne.s32.totalorder %s59, %s73
      %p75 = scmp.eq.s32.totalorder %s28, 0
      %p76 = por %p74, %p75
      %s78 = sadd.s32 %s77, 1
      %p81 = scmp.eq.s32.totalorder %s22, 1
      %p82 = scmp.ne.s32.totalorder %s77, %s79
      %p83 = scmp.eq.s32.totalorder %s22, 0
      %p84 = por %p82, %p83
      %p85 = scmp.ne.s32.totalorder %s77, %s79
      %p86 = scmp.eq.s32.totalorder %s27, 1
      %p87 = por %p85, %p86
      %p88 = scmp.ne.s32.totalorder %s79, %s80
      %p89 = scmp.eq.s32.totalorder %s27, 0
      %p90 = por %p88, %p89
      %p91 = scmp.ne.s32.totalorder %s79, %s80
      %p92 = scmp.eq.s32.totalorder %s28, 1
      %p93 = por %p91, %p92
      %p95 = scmp.ne.s32.totalorder %s80, %s94
      %p96 = scmp.eq.s32.totalorder %s28, 0
      %p97 = por %p95, %p96
      %s99 = sadd.s32 %s98, 1
      %p102 = scmp.eq.s32.totalorder %s22, 1
      %p103 = scmp.ne.s32.totalorder %s98, %s100
      %p104 = scmp.eq.s32.totalorder %s22, 0
      %p105 = por %p103, %p104
      %p106 = scmp.ne.s32.totalorder %s98, %s100
      %p107 = scmp.eq.s32.totalorder %s27, 1
      %p108 = por %p106, %p107
      %p109 = scmp.ne.s32.totalorder %s100, %s101
      %p110 = scmp.eq.s32.totalorder %s27, 0
      %p111 = por %p109, %p110
      %p112 = scmp.ne.s32.totalorder %s100, %s101
      %p113 = scmp.eq.s32.totalorder %s28, 1
      %p114 = por %p112, %p113
      %p116 = scmp.ne.s32.totalorder %s101, %s115
      %p117 = scmp.eq.s32.totalorder %s28, 0
      %p118 = por %p116, %p117
      %s120 = sadd.s32 %s119, 1
      %p123 = scmp.eq.s32.totalorder %s22, 1
      %p124 = scmp.ne.s32.totalorder %s119, %s121
      %p125 = scmp.eq.s32.totalorder %s22, 0
      %p126 = por %p124, %p125
      %p127 = scmp.ne.s32.totalorder %s119, %s121
      %p128 = scmp.eq.s32.totalorder %s27, 1
      %p129 = por %p127, %p128
      %p130 = scmp.ne.s32.totalorder %s121, %s122
      %p131 = scmp.eq.s32.totalorder %s27, 0
      %p132 = por %p130, %p131
      %p133 = scmp.ne.s32.totalorder %s121, %s122
      %p134 = scmp.eq.s32.totalorder %s28, 1
      %p135 = por %p133, %p134
      %p137 = scmp.ne.s32.totalorder %s122, %s136
      %p138 = scmp.eq.s32.totalorder %s28, 0
      %p139 = por %p137, %p138
      %s141 = sadd.s32 %s140, 1
      %p144 = scmp.eq.s32.totalorder %s22, 1
      %p145 = scmp.ne.s32.totalorder %s140, %s142
      %p146 = scmp.eq.s32.totalorder %s22, 0
      %p147 = por %p145, %p146
      %p148 = scmp.ne.s32.totalorder %s140, %s142
      %p149 = scmp.eq.s32.totalorder %s27, 1
      %p150 = por %p148, %p149
      %p151 = scmp.ne.s32.totalorder %s142, %s143
      %p152 = scmp.eq.s32.totalorder %s27, 0
      %p153 = por %p151, %p152
      %p154 = scmp.ne.s32.totalorder %s142, %s143
      %p155 = scmp.eq.s32.totalorder %s28, 1
      %p156 = por %p154, %p155
      %p158 = scmp.ne.s32.totalorder %s143, %s157
      %p159 = scmp.eq.s32.totalorder %s28, 0
      %p160 = por %p158, %p159
      %s162 = sadd.s32 %s161, 1
      %p165 = scmp.eq.s32.totalorder %s22, 1
      %p166 = scmp.ne.s32.totalorder %s161, %s163
      %p167 = scmp.eq.s32.totalorder %s22, 0
      %p168 = por %p166, %p167
      %p169 = scmp.ne.s32.totalorder %s161, %s163
      %p170 = scmp.eq.s32.totalorder %s27, 1
      %p171 = por %p169, %p170
      %p172 = scmp.ne.s32.totalorder %s163, %s164
      %p173 = scmp.eq.s32.totalorder %s27, 0
      %p174 = por %p172, %p173
      %p175 = scmp.ne.s32.totalorder %s163, %s164
      %p176 = scmp.eq.s32.totalorder %s28, 1
      %p177 = por %p175, %p176
      %p179 = scmp.ne.s32.totalorder %s164, %s178
      %p180 = scmp.eq.s32.totalorder %s28, 0
      %p181 = por %p179, %p180
      %s183 = sadd.s32 %s182, 1
      %p186 = scmp.eq.s32.totalorder %s22, 1
      %p187 = scmp.ne.s32.totalorder %s182, %s184
      %p188 = scmp.eq.s32.totalorder %s22, 0
      %p189 = por %p187, %p188
      %p190 = scmp.ne.s32.totalorder %s182, %s184
      %p191 = scmp.eq.s32.totalorder %s27, 1
      %p192 = por %p190, %p191
      %p193 = scmp.ne.s32.totalorder %s184, %s185
      %p194 = scmp.eq.s32.totalorder %s27, 0
      %p195 = por %p193, %p194
      %p196 = scmp.ne.s32.totalorder %s184, %s185
      %p197 = scmp.eq.s32.totalorder %s28, 1
      %p198 = por %p196, %p197
      %p200 = scmp.ne.s32.totalorder %s185, %s199
      %p201 = scmp.eq.s32.totalorder %s28, 0
      %p202 = por %p200, %p201
      %s203 = ssub.s32 %s22, %s29
      %p204 = scmp.eq.s32.totalorder %s203, 0
      %s206 = sadd.s32 %s205, 1
      %s207 = scalar_select %p204, %s205, %s206
      %p210 = pneg %p204
      %p211 = scmp.eq.s32.totalorder %s22, 1
      %p212 = por %p210, %p211
      %p213 = scmp.ne.s32.totalorder %s205, %s208
      %p214 = scmp.eq.s32.totalorder %s22, 0
      %p215 = por %p213, %p214
      %p216 = scmp.ne.s32.totalorder %s205, %s208
      %p217 = scmp.eq.s32.totalorder %s27, 1
      %p218 = por %p216, %p217
      %p219 = scmp.ne.s32.totalorder %s208, %s209
      %p220 = scmp.eq.s32.totalorder %s27, 0
      %p221 = por %p219, %p220
      %p222 = scmp.ne.s32.totalorder %s208, %s209
      %p223 = scmp.eq.s32.totalorder %s28, 1
      %p224 = por %p222, %p223
      %p226 = scmp.ne.s32.totalorder %s209, %s225
      %p227 = scmp.eq.s32.totalorder %s28, 0
      %p228 = por %p226, %p227
      %p229 = scmp.le.s32.totalorder 1, %s22
      %p230 = scmp.lt.s32.totalorder %s22, 3
      %p231 = pnand %p229, %p230
      %p232 = pneg %p231
      // Predicated region
      $region9: #{tpu_custom_call.1} parent=5 // pred_check
        _
      $region10: #{tpu_custom_call.1} parent=5 // pred_check_branch
        %234 = sbr.rel (%p231) target = $region12
      $region11: #{tpu_custom_call.1} parent=5 // pred_region
        %s235 = ssub.s32 %s22, 1
        // Predicated region
        $region13: #{tpu_custom_call.1} parent=11 // pred_check
          %p236 = pneg %p69
        $region14: #{tpu_custom_call.1} parent=11 // pred_check_branch
          %238 = sbr.rel (%p236) target = $region16
        $region15: #{tpu_custom_call.1} parent=11 // pred_region
          %240 = vsyncadd [#allocation6], 0
          %s242 = sshll.u32 %s1, 4
          %s243 = int_to_ptr.hbm [resolvable:$true] %s242
          %s244 = sshll.u32 [#allocation5], 4
          %s245 = int_to_ptr.vmem [resolvable:$true] %s244
          %247 = dma.hbm_to_vmem [thread:$0]  %s243, 16, %s245, [#allocation6]
        $region16: #{tpu_custom_call.1} parent=11 // pred_fallthru
          _
        // Predicated region
        $region17: #{tpu_custom_call.1} parent=11 // pred_check
          %p248 = pneg %p90
        $region18: #{tpu_custom_call.1} parent=11 // pred_check_branch
          %250 = sbr.rel (%p248) target = $region20
        $region19: #{tpu_custom_call.1} parent=11 // pred_region
          _
        $region20: #{tpu_custom_call.1} parent=11 // pred_fallthru
          _
        // Predicated region
        $region21: #{tpu_custom_call.1} parent=11 // pred_check
          %p251 = pneg %p111
        $region22: #{tpu_custom_call.1} parent=11 // pred_check_branch
          %253 = sbr.rel (%p251) target = $region24
        $region23: #{tpu_custom_call.1} parent=11 // pred_region
          %255 = vsyncadd [#allocation6], 0
          %s256 = sshll.u32 %s3, 4
          %s257 = int_to_ptr.hbm [resolvable:$true] %s256
          %s258 = sshll.u32 [#allocation7], 4
          %s259 = int_to_ptr.vmem [resolvable:$true] %s258
          %264 = dma.hbm_to_vmem [thread:$0]  %s257, 256, %s259, [#allocation6], 64, 64, 4
        $region24: #{tpu_custom_call.1} parent=11 // pred_fallthru
          _
        // Predicated region
        $region25: #{tpu_custom_call.1} parent=11 // pred_check
          %p265 = pneg %p132
        $region26: #{tpu_custom_call.1} parent=11 // pred_check_branch
          %267 = sbr.rel (%p265) target = $region28
        $region27: #{tpu_custom_call.1} parent=11 // pred_region
          _
        $region28: #{tpu_custom_call.1} parent=11 // pred_fallthru
          _
        // Predicated region
        $region29: #{tpu_custom_call.1} parent=11 // pred_check
          %p268 = pneg %p153
        $region30: #{tpu_custom_call.1} parent=11 // pred_check_branch
          %270 = sbr.rel (%p268) target = $region32
        $region31: #{tpu_custom_call.1} parent=11 // pred_region
          %272 = vsyncadd [#allocation9], 0
          %s273 = sshll.u32 %s5, 4
          %s274 = int_to_ptr.hbm [resolvable:$true] %s273
          %s275 = sshll.u32 [#allocation8], 4
          %s276 = int_to_ptr.vmem [resolvable:$true] %s275
          %281 = dma.hbm_to_vmem [thread:$0]  %s274, 256, %s276, [#allocation9], 64, 64, 4
        $region32: #{tpu_custom_call.1} parent=11 // pred_fallthru
          _
        // Predicated region
        $region33: #{tpu_custom_call.1} parent=11 // pred_check
          %p282 = pneg %p174
        $region34: #{tpu_custom_call.1} parent=11 // pred_check_branch
          %284 = sbr.rel (%p282) target = $region36
        $region35: #{tpu_custom_call.1} parent=11 // pred_region
          _
        $region36: #{tpu_custom_call.1} parent=11 // pred_fallthru
          _
        // Predicated region
        $region37: #{tpu_custom_call.1} parent=11 // pred_check
          %p285 = pneg %p195
        $region38: #{tpu_custom_call.1} parent=11 // pred_check_branch
          %287 = sbr.rel (%p285) target = $region40
        $region39: #{tpu_custom_call.1} parent=11 // pred_region
          %289 = vsyncadd [#allocation9], 0
          %s291 = sshll.u32 %s7, 4
          %s292 = int_to_ptr.hbm [resolvable:$true] %s291
          %s293 = sshll.u32 [#allocation10], 4
          %s294 = int_to_ptr.vmem [resolvable:$true] %s293
          %296 = dma.hbm_to_vmem [thread:$0]  %s292, 128, %s294, [#allocation9]
        $region40: #{tpu_custom_call.1} parent=11 // pred_fallthru
          _
      $region12: #{tpu_custom_call.1} parent=5 // pred_fallthru
        _
      %p297 = scmp.lt.s32.totalorder %s22, 2
      // Predicated region
      $region41: #{tpu_custom_call.1} parent=5 // pred_check
        %p298 = pneg %p297
      $region42: #{tpu_custom_call.1} parent=5 // pred_check_branch
        %300 = sbr.rel (%p298) target = $region44
      $region43: #{tpu_custom_call.1} parent=5 // pred_region
        // Predicated region
        $region45: #{tpu_custom_call.1} parent=43 // pred_check
          %p301 = pneg %p42
        $region46: #{tpu_custom_call.1} parent=43 // pred_check_branch
          %303 = sbr.rel (%p301) target = $region48
        $region47: #{tpu_custom_call.1} parent=43 // pred_region
          %s304 = sand.u32 %s32, 1
          %s305 = scalar_lea.sflag [#allocation3], %s304
          %s306 = sand.u32 %s32, 1
          %s307 = smul.addr %s306, 8
          %s308 = scalar_lea.vmem [#allocation2], %s307
          %310 = vsyncadd %s305, 0
          %s311 = smul.addr %s22, 8
          %s312 = scalar_lea.hbm %s0, %s311
          %s314 = sshll.u32 %s312, 4
          %s315 = int_to_ptr.hbm [resolvable:$true] %s314
          %s316 = sshll.u32 %s308, 4
          %s317 = int_to_ptr.vmem [resolvable:$true] %s316
          %319 = dma.hbm_to_vmem [thread:$0]  %s315, 128, %s317, %s305
        $region48: #{tpu_custom_call.1} parent=43 // pred_fallthru
          _
      $region44: #{tpu_custom_call.1} parent=5 // pred_fallthru
        _
      %p320 = scmp.le.s32.totalorder 1, %s22
      %p321 = scmp.lt.s32.totalorder %s22, 3
      %p322 = pnand %p320, %p321
      %p323 = pneg %p322
      // Predicated region
      $region49: #{tpu_custom_call.1} parent=5 // pred_check
        _
      $region50: #{tpu_custom_call.1} parent=5 // pred_check_branch
        %325 = sbr.rel (%p322) target = $region52
      $region51: #{tpu_custom_call.1} parent=5 // pred_region
        %s326 = ssub.s32 %s22, 1
        %s327 = sand.u32 %s35, 1
        %s328 = scalar_lea.sflag [#allocation3], %s327
        %s329 = sand.u32 %s35, 1
        %s330 = smul.addr %s329, 8
        %s331 = scalar_lea.vmem [#allocation2], %s330
        // Predicated region
        $region53: #{tpu_custom_call.1} parent=51 // pred_check
          %p332 = pneg %p48
        $region54: #{tpu_custom_call.1} parent=51 // pred_check_branch
          %334 = sbr.rel (%p332) target = $region56
        $region55: #{tpu_custom_call.1} parent=51 // pred_region
          %336 = dma.done %s328, 128
        $region56: #{tpu_custom_call.1} parent=51 // pred_fallthru
          _
        // Predicated region
        $region57: #{tpu_custom_call.1} parent=51 // pred_check
          %p337 = pneg %p69
        $region58: #{tpu_custom_call.1} parent=51 // pred_check_branch
          %339 = sbr.rel (%p337) target = $region60
        $region59: #{tpu_custom_call.1} parent=51 // pred_region
          %341 = dma.done [#allocation6], 16
        $region60: #{tpu_custom_call.1} parent=51 // pred_fallthru
          _
        // Predicated region
        $region61: #{tpu_custom_call.1} parent=51 // pred_check
          %p342 = pneg %p111
        $region62: #{tpu_custom_call.1} parent=51 // pred_check_branch
          %344 = sbr.rel (%p342) target = $region64
        $region63: #{tpu_custom_call.1} parent=51 // pred_region
          %346 = dma.done [#allocation6], 256
        $region64: #{tpu_custom_call.1} parent=51 // pred_fallthru
          _
        // Predicated region
        $region65: #{tpu_custom_call.1} parent=51 // pred_check
          %p347 = pneg %p153
        $region66: #{tpu_custom_call.1} parent=51 // pred_check_branch
          %349 = sbr.rel (%p347) target = $region68
        $region67: #{tpu_custom_call.1} parent=51 // pred_region
          %351 = dma.done [#allocation9], 256
        $region68: #{tpu_custom_call.1} parent=51 // pred_fallthru
          _
        // Predicated region
        $region69: #{tpu_custom_call.1} parent=51 // pred_check
          %p352 = pneg %p195
        $region70: #{tpu_custom_call.1} parent=51 // pred_check_branch
          %354 = sbr.rel (%p352) target = $region72
        $region71: #{tpu_custom_call.1} parent=51 // pred_region
          %356 = dma.done [#allocation9], 128
        $region72: #{tpu_custom_call.1} parent=51 // pred_fallthru
          _
        %s357 = sand.u32 %s35, 1
        %s358 = scalar_lea.sflag [#allocation3], %s357
        %s359 = sand.u32 %s35, 1
        %s360 = smul.addr %s359, 8
        %s361 = scalar_lea.vmem [#allocation2], %s360
        %p362 = pneg %p48
        %p363 = pneg %p45
        %p364 = pneg %p69
        %p365 = pneg %p66
        %p366 = pneg %p90
        %p367 = pneg %p87
        %p368 = pneg %p111
        %p369 = pneg %p108
        %p370 = pneg %p132
        %p371 = pneg %p129
        %p372 = pneg %p153
        %p373 = pneg %p150
        %p374 = pneg %p174
        %p375 = pneg %p171
        %p376 = pneg %p195
        %p377 = pneg %p192
        %p378 = pneg %p221
        %p379 = pneg %p218
        %s380 = sand.u32 %s208, 1
        %s381 = scalar_lea.sflag [#allocation4], %s380
        %s382 = sand.u32 %s208, 1
        %s383 = smul.addr %s382, 8
        %s384 = scalar_lea.vmem [#allocation11], %s383
        %v386 = vld [vmem:[%s331] sm:$0xff]
        %v387 = vld [vmem:[#allocation5] sm:$0x1]
        %v388 = vld [vmem:[%s2] sm:$0x1]
        %vm389 = vcmask 261120
        %v390 = vsel %vm389, %v386, 0.0
        %391 = vadd.xlane.f32.xlu0 %v390
        %v392 = vpop.xlane.xlu0 %391
        %v393 = vrcp.pop 32.0
        %v394 = vmul.f32 32.0, %v393
        %v395 = vsub.f32 1.0, %v394
        %v396 = vmul.f32 %v393, %v395
        %v397 = vadd.f32 %v393, %v396
        %vm398 = vweird.f32 %v393
        %v399 = vsel %vm398, %v393, %v397
        %v400 = vmul.f32 %v392, %v399
        %v401 = vsub.f32 %v386, %v400
        %v402 = vmul.f32 %v401, %v401
        %v403 = vsel %vm389, %v402, 0.0
        %404 = vadd.xlane.f32.xlu0 %v403
        %v405 = vpop.xlane.xlu0 %404
        %v406 = vmul.f32 %v405, %v399
        %v407 = vadd.f32 %v406, 1e-05
        %v408 = vrsqrt.pop %v407
        %v409 = vmul.f32 %v408, %v407
        %v410 = vmul.f32 %v409, %v408
        %v411 = vmul.f32 0.5, %v410
        %v412 = vsub.f32 1.5, %v411
        %v413 = vmul.f32 %v408, %v412
        %vm414 = vweird.f32 %v407
        %vm415 = vweird.f32 %v408
        %vm416 = vmor %vm414, %vm415
        %v417 = vsel %vm416, %v408, %v413
        %v418 = vmul.f32 %v401, %v417
        %v420 = vperm.slane %v387, 0
        %v422 = vmul.f32 %v418, %v420
        %v424 = vperm.slane %v388, 0
        %v426 = vadd.f32 %v422, %v424
        %v427 = vpack.c.bf16 %v426, %v426
        %v428 = vld [vmem:[#allocation7] sm:$0xf]
        %v429 = vld [vmem:[#allocation7 + $0x4] sm:$0xf]
        %v430 = vld [vmem:[#allocation7 + $0x8] sm:$0xf]
        %v431 = vld [vmem:[#allocation7 + $0xc] sm:$0xf]
        %v432 = vld [vmem:[%s4] sm:$0x1]
        %v434 = vperm.slane %v432, 0
        %v440 = vunpack.c.l.b16 %v428
        %v441 = vunpack.c.l.b16 %v429
        %v442 = vunpack.c.l.b16 %v430
        %v443 = vunpack.c.l.b16 %v431
        %v444 = vpack.c.b16 %v441, %v440
        %v445 = vpack.c.b16 %v443, %v442
        %v449 = vsel %vm389, %v427, 0
        %451 = vmatpush.bf16.msra.mxu0 0
        %452 = vmatpush.bf16.msra.mxu0 0
        %453 = vmatpush.bf16.msra.mxu0 0
        %454 = vmatpush.bf16.msra.mxu0 0
        %455 = vmatpush.bf16.msra.mxu0 0
        %456 = vmatpush.bf16.msra.mxu0 0
        %457 = vmatpush.bf16.msra.mxu0 %v445
        %458 = vmatpush.bf16.msra.mxu0 %v444
        %459 = vmatmul.bf16.gmra.mxu0 %v449
        %v460 = vpop.f32.mrf.mxu0
        %v461 = vadd.f32 %v434, %v460
        %v462 = vpop.f32.mrf.mxu0
        %463 = vdwg.mxu0
        %v464 = vld [vmem:[#allocation10] sm:$0xff]
        %v465 = vmul.f32 %v461, 0.35355338
        %v466 = vpack.c.bf16 %v465, %v465
        %v467 = vpack.c.bf16 %v461, %v461
        %469 = vrot.lane.b32.xlu0 %v467, 96
        %v470 = vpop.permute.xlu0 %469
        %vm471 = vcmask 64512
        %v473 = vsel %vm471, %v466, 0
        %v476 = vsel %vm471, %v470, 0
        %478 = vmatpush.bf16.xpose.msra.mxu0 0
        %479 = vmatpush.bf16.xpose.msra.mxu0 0
        %480 = vmatpush.bf16.xpose.msra.mxu0 0
        %481 = vmatpush.bf16.xpose.msra.mxu0 0
        %482 = vmatpush.bf16.xpose.msra.mxu0 0
        %483 = vmatpush.bf16.xpose.msra.mxu0 0
        %484 = vmatpush.bf16.xpose.msra.mxu0 0
        %485 = vmatpush.bf16.xpose.msra.mxu0 %v476
        %486 = vmatmul.bf16.gmra.mxu0 %v473
        %v487 = vpop.f32.mrf.mxu0
        %v488 = vadd.f32 %v464, %v487
        %v489 = vpop.f32.mrf.mxu0
        %490 = vdwg.mxu0
        %v491 = vsel %vm471, %v488, -inf
        %492 = vmax.xlane.f32.xlu0 %v491
        %v493 = vpop.xlane.xlu0 %492
        %v494 = vsub.f32 %v488, %v493
        %v495 = vmul.f32 %v494, 1.442695
        %v496 = vpow.pop %v495
        %v497 = vsel %vm471, %v496, 0.0
        %498 = vadd.xlane.f32.xlu0 %v497
        %v499 = vpop.xlane.xlu0 %498
        %v500 = vrcp.pop %v499
        %v501 = vmul.f32 %v496, %v500
        %v502 = vpack.c.bf16 %v501, %v501
        %503 = vrot.lane.b32.xlu0 %v467, 64
        %v504 = vpop.permute.xlu0 %503
        %v506 = vsel %vm471, %v502, 0
        %vm508 = vcmask 1043456
        %v510 = vsel %vm508, %v504, 0
        %512 = vmatpush.bf16.msra.mxu0 0
        %513 = vmatpush.bf16.msra.mxu0 0
        %514 = vmatpush.bf16.msra.mxu0 0
        %515 = vmatpush.bf16.msra.mxu0 0
        %516 = vmatpush.bf16.msra.mxu0 0
        %517 = vmatpush.bf16.msra.mxu0 0
        %518 = vmatpush.bf16.msra.mxu0 0
        %519 = vmatpush.bf16.msra.mxu0 %v510
        %520 = vmatmul.bf16.gmra.mxu0 %v506
        %v521 = vpop.f32.mrf.mxu0
        %v522 = vadd.f32 0.0, %v521
        %v523 = vpop.f32.mrf.mxu0
        %524 = vdwg.mxu0
        %526 = vrot.lane.b32.xlu0 %v466, 120
        %v527 = vpop.permute.xlu0 %526
        %528 = vrot.lane.b32.xlu0 %v467, 88
        %v529 = vpop.permute.xlu0 %528
        %v531 = vsel %vm471, %v527, 0
        %v534 = vsel %vm471, %v529, 0
        %536 = vmatpush.bf16.xpose.msra.mxu0 0
        %537 = vmatpush.bf16.xpose.msra.mxu0 0
        %538 = vmatpush.bf16.xpose.msra.mxu0 0
        %539 = vmatpush.bf16.xpose.msra.mxu0 0
        %540 = vmatpush.bf16.xpose.msra.mxu0 0
        %541 = vmatpush.bf16.xpose.msra.mxu0 0
        %542 = vmatpush.bf16.xpose.msra.mxu0 0
        %543 = vmatpush.bf16.xpose.msra.mxu0 %v534
        %544 = vmatmul.bf16.gmra.mxu0 %v531
        %v545 = vpop.f32.mrf.mxu0
        %v546 = vadd.f32 %v464, %v545
        %v547 = vpop.f32.mrf.mxu0
        %548 = vdwg.mxu0
        %v549 = vsel %vm471, %v546, -inf
        %550 = vmax.xlane.f32.xlu0 %v549
        %v551 = vpop.xlane.xlu0 %550
        %v552 = vsub.f32 %v546, %v551
        %v553 = vmul.f32 %v552, 1.442695
        %v554 = vpow.pop %v553
        %v555 = vsel %vm471, %v554, 0.0
        %556 = vadd.xlane.f32.xlu0 %v555
        %v557 = vpop.xlane.xlu0 %556
        %v558 = vrcp.pop %v557
        %v559 = vmul.f32 %v554, %v558
        %v560 = vpack.c.bf16 %v559, %v559
        %561 = vrot.lane.b32.xlu0 %v467, 56
        %v562 = vpop.permute.xlu0 %561
        %v564 = vsel %vm471, %v560, 0
        %v567 = vsel %vm508, %v562, 0
        %569 = vmatpush.bf16.msra.mxu0 0
        %570 = vmatpush.bf16.msra.mxu0 0
        %571 = vmatpush.bf16.msra.mxu0 0
        %572 = vmatpush.bf16.msra.mxu0 0
        %573 = vmatpush.bf16.msra.mxu0 0
        %574 = vmatpush.bf16.msra.mxu0 0
        %575 = vmatpush.bf16.msra.mxu0 0
        %576 = vmatpush.bf16.msra.mxu0 %v567
        %577 = vmatmul.bf16.gmra.mxu0 %v564
        %v578 = vpop.f32.mrf.mxu0
        %v579 = vadd.f32 0.0, %v578
        %v580 = vpop.f32.mrf.mxu0
        %581 = vdwg.mxu0
        %582 = vrot.lane.b32.xlu0 %v466, 112
        %v583 = vpop.permute.xlu0 %582
        %584 = vrot.lane.b32.xlu0 %v467, 80
        %v585 = vpop.permute.xlu0 %584
        %v587 = vsel %vm471, %v583, 0
        %v590 = vsel %vm471, %v585, 0
        %592 = vmatpush.bf16.xpose.msra.mxu0 0
        %593 = vmatpush.bf16.xpose.msra.mxu0 0
        %594 = vmatpush.bf16.xpose.msra.mxu0 0
        %595 = vmatpush.bf16.xpose.msra.mxu0 0
        %596 = vmatpush.bf16.xpose.msra.mxu0 0
        %597 = vmatpush.bf16.xpose.msra.mxu0 0
        %598 = vmatpush.bf16.xpose.msra.mxu0 0
        %599 = vmatpush.bf16.xpose.msra.mxu0 %v590
        %600 = vmatmul.bf16.gmra.mxu0 %v587
        %v601 = vpop.f32.mrf.mxu0
        %v602 = vadd.f32 %v464, %v601
        %v603 = vpop.f32.mrf.mxu0
        %604 = vdwg.mxu0
        %v605 = vsel %vm471, %v602, -inf
        %606 = vmax.xlane.f32.xlu0 %v605
        %v607 = vpop.xlane.xlu0 %606
        %v608 = vsub.f32 %v602, %v607
        %v609 = vmul.f32 %v608, 1.442695
        %v610 = vpow.pop %v609
        %v611 = vsel %vm471, %v610, 0.0
        %612 = vadd.xlane.f32.xlu0 %v611
        %v613 = vpop.xlane.xlu0 %612
        %v614 = vrcp.pop %v613
        %v615 = vmul.f32 %v610, %v614
        %v616 = vpack.c.bf16 %v615, %v615
        %617 = vrot.lane.b32.xlu0 %v467, 48
        %v618 = vpop.permute.xlu0 %617
        %v620 = vsel %vm471, %v616, 0
        %v623 = vsel %vm508, %v618, 0
        %625 = vmatpush.bf16.msra.mxu0 0
        %626 = vmatpush.bf16.msra.mxu0 0
        %627 = vmatpush.bf16.msra.mxu0 0
        %628 = vmatpush.bf16.msra.mxu0 0
        %629 = vmatpush.bf16.msra.mxu0 0
        %630 = vmatpush.bf16.msra.mxu0 0
        %631 = vmatpush.bf16.msra.mxu0 0
        %632 = vmatpush.bf16.msra.mxu0 %v623
        %633 = vmatmul.bf16.gmra.mxu0 %v620
        %v634 = vpop.f32.mrf.mxu0
        %v635 = vadd.f32 0.0, %v634
        %v636 = vpop.f32.mrf.mxu0
        %637 = vdwg.mxu0
        %638 = vrot.lane.b32.xlu0 %v466, 104
        %v639 = vpop.permute.xlu0 %638
        %640 = vrot.lane.b32.xlu0 %v467, 72
        %v641 = vpop.permute.xlu0 %640
        %v643 = vsel %vm471, %v639, 0
        %v646 = vsel %vm471, %v641, 0
        %648 = vmatpush.bf16.xpose.msra.mxu0 0
        %649 = vmatpush.bf16.xpose.msra.mxu0 0
        %650 = vmatpush.bf16.xpose.msra.mxu0 0
        %651 = vmatpush.bf16.xpose.msra.mxu0 0
        %652 = vmatpush.bf16.xpose.msra.mxu0 0
        %653 = vmatpush.bf16.xpose.msra.mxu0 0
        %654 = vmatpush.bf16.xpose.msra.mxu0 0
        %655 = vmatpush.bf16.xpose.msra.mxu0 %v646
        %656 = vmatmul.bf16.gmra.mxu0 %v643
        %v657 = vpop.f32.mrf.mxu0
        %v658 = vadd.f32 %v464, %v657
        %v659 = vpop.f32.mrf.mxu0
        %660 = vdwg.mxu0
        %v661 = vsel %vm471, %v658, -inf
        %662 = vmax.xlane.f32.xlu0 %v661
        %v663 = vpop.xlane.xlu0 %662
        %v664 = vsub.f32 %v658, %v663
        %v665 = vmul.f32 %v664, 1.442695
        %v666 = vpow.pop %v665
        %v667 = vsel %vm471, %v666, 0.0
        %668 = vadd.xlane.f32.xlu0 %v667
        %v669 = vpop.xlane.xlu0 %668
        %v670 = vrcp.pop %v669
        %v671 = vmul.f32 %v666, %v670
        %v672 = vpack.c.bf16 %v671, %v671
        %673 = vrot.lane.b32.xlu0 %v467, 40
        %v674 = vpop.permute.xlu0 %673
        %v676 = vsel %vm471, %v672, 0
        %v679 = vsel %vm508, %v674, 0
        %681 = vmatpush.bf16.msra.mxu0 0
        %682 = vmatpush.bf16.msra.mxu0 0
        %683 = vmatpush.bf16.msra.mxu0 0
        %684 = vmatpush.bf16.msra.mxu0 0
        %685 = vmatpush.bf16.msra.mxu0 0
        %686 = vmatpush.bf16.msra.mxu0 0
        %687 = vmatpush.bf16.msra.mxu0 0
        %688 = vmatpush.bf16.msra.mxu0 %v679
        %689 = vmatmul.bf16.gmra.mxu0 %v676
        %v690 = vpop.f32.mrf.mxu0
        %v691 = vadd.f32 0.0, %v690
        %v692 = vpop.f32.mrf.mxu0
        %693 = vdwg.mxu0
        %695 = vrot.lane.b32.xlu0 %v579, 8
        %v696 = vpop.permute.xlu0 %695
        %699 = vrot.lane.b32.xlu0 %v635, 16
        %v700 = vpop.permute.xlu0 %699
        %703 = vrot.lane.b32.xlu0 %v691, 24
        %v704 = vpop.permute.xlu0 %703
        %v706 = vsel %vm471, %v522, %v696
        %vm707 = vcmask 130048
        %v708 = vsel %vm707, %v706, %v700
        %vm709 = vcmask 195584
        %v710 = vsel %vm709, %v708, %v704
        %v711 = vpack.c.bf16 %v710, %v710
        %v712 = vld [vmem:[#allocation8] sm:$0xf]
        %v713 = vld [vmem:[#allocation8 + $0x4] sm:$0xf]
        %v714 = vld [vmem:[#allocation8 + $0x8] sm:$0xf]
        %v715 = vld [vmem:[#allocation8 + $0xc] sm:$0xf]
        %v716 = vld [vmem:[%s6] sm:$0x1]
        %v718 = vperm.slane %v716, 0
        %v724 = vunpack.c.l.b16 %v712
        %v725 = vunpack.c.l.b16 %v713
        %v726 = vunpack.c.l.b16 %v714
        %v727 = vunpack.c.l.b16 %v715
        %v728 = vpack.c.b16 %v725, %v724
        %v729 = vpack.c.b16 %v727, %v726
        %v733 = vsel %vm389, %v711, 0
        %735 = vmatpush.bf16.msra.mxu0 0
        %736 = vmatpush.bf16.msra.mxu0 0
        %737 = vmatpush.bf16.msra.mxu0 0
        %738 = vmatpush.bf16.msra.mxu0 0
        %739 = vmatpush.bf16.msra.mxu0 0
        %740 = vmatpush.bf16.msra.mxu0 0
        %741 = vmatpush.bf16.msra.mxu0 %v729
        %742 = vmatpush.bf16.msra.mxu0 %v728
        %743 = vmatmul.bf16.gmra.mxu0 %v733
        %v744 = vpop.f32.mrf.mxu0
        %v745 = vadd.f32 %v718, %v744
        %v746 = vpop.f32.mrf.mxu0
        %747 = vdwg.mxu0
        %v748 = vadd.f32 %v386, %v745
        %749 = vst.msk [vmem:[%s384] sm:$0xff] %vm389, %v748
        %s750 = sand.u32 %s208, 1
        %s751 = scalar_lea.sflag [#allocation4], %s750
        %s752 = sand.u32 %s208, 1
        %s753 = smul.addr %s752, 8
        %s754 = scalar_lea.vmem [#allocation11], %s753
        // Predicated region
        $region73: #{tpu_custom_call.1} parent=51 // pred_check
          %p755 = pneg %p218
        $region74: #{tpu_custom_call.1} parent=51 // pred_check_branch
          %757 = sbr.rel (%p755) target = $region76
        $region75: #{tpu_custom_call.1} parent=51 // pred_region
          %759 = vsyncadd %s751, 0
          %s760 = smul.addr %s27, 8
          %s761 = scalar_lea.hbm %s8, %s760
          %s763 = sshll.u32 %s754, 4
          %s764 = int_to_ptr.vmem [resolvable:$true] %s763
          %s765 = sshll.u32 %s761, 4
          %s766 = int_to_ptr.hbm [resolvable:$true] %s765
          %768 = dma.vmem_to_hbm [thread:$0]  %s764, 128, %s766, %s751
        $region76: #{tpu_custom_call.1} parent=51 // pred_fallthru
          _
      $region52: #{tpu_custom_call.1} parent=5 // pred_fallthru
        _
      %p769 = scmp.le.s32.totalorder 2, %s22
      // Predicated region
      $region77: #{tpu_custom_call.1} parent=5 // pred_check
        %p770 = pneg %p769
      $region78: #{tpu_custom_call.1} parent=5 // pred_check_branch
        %772 = sbr.rel (%p770) target = $region80
      $region79: #{tpu_custom_call.1} parent=5 // pred_region
        %s773 = ssub.s32 %s22, 2
        // Predicated region
        $region81: #{tpu_custom_call.1} parent=79 // pred_check
          %p774 = pneg %p224
        $region82: #{tpu_custom_call.1} parent=79 // pred_check_branch
          %776 = sbr.rel (%p774) target = $region84
        $region83: #{tpu_custom_call.1} parent=79 // pred_region
          %s777 = sand.u32 %s209, 1
          %s778 = scalar_lea.sflag [#allocation4], %s777
          %s779 = sand.u32 %s209, 1
          %s780 = smul.addr %s779, 8
          %s781 = scalar_lea.vmem [#allocation11], %s780
          %783 = dma.done %s778, 128
        $region84: #{tpu_custom_call.1} parent=79 // pred_fallthru
          _
      $region80: #{tpu_custom_call.1} parent=5 // pred_fallthru
        _
    $region6: #{tpu_custom_call.1} parent=1 // loop_footer
      %s26 = sadd.s32 1, %s22
    $region7: #{tpu_custom_call.1} parent=1 // loop_footer_branch
      %21 = sbr.rel target = $region3
    $region8: #{tpu_custom_call.1} parent=1 // loop_exit
      _
    %784 = vsyncpa [#allocation3], 1
    %s785 = scalar_lea.sflag [#allocation3], 1
    %786 = vsyncpa %s785, 1
    %787 = vsyncpa [#allocation6], 1
    %788 = vsyncpa [#allocation9], 1
    %789 = vsyncpa [#allocation4], 1
    %s790 = scalar_lea.sflag [#allocation4], 1
    %791 = vsyncpa %s790, 1

</llo_original>
